<compile_context>
chip_gen: v7x
topology: tpu7x:2x2x1
jax: 0.10.0
libtpu: 0.0.40
codegen_flags: <defaults>
</compile_context>

<pallas_src>
import functools

import jax
import jax.numpy as jnp
from jax.experimental import pallas as pl
from jax.experimental.pallas import tpu as pltpu


def _share_kernel(x_ref, o_ref, *, share, frame, ch):
    """x_ref: (frame, ch, T) f32 tile; o_ref: (frame, 2*ch, T) f32 tile."""
    x = x_ref[...]                                        # (F, C, T)
    if share:
        x_max = jnp.max(x, axis=0)                        # (C, T)
        x_mean = jnp.sum(x, axis=0) * (1.0 / frame)       # (C, T)
        o_ref[:, :ch, :] = jnp.broadcast_to(x_max[None, :, :], x.shape)
        o_ref[:, ch:, :] = jnp.broadcast_to(x_mean[None, :, :], x.shape)
    else:
        o_ref[:, :ch, :] = x
        o_ref[:, ch:, :] = x


def _pick_tile(hw):
    """Largest lane-dense spatial tile: full extent unless it is big, in which
    case the largest multiple-of-128 divisor <= 2048."""
    if hw % 128 != 0 or hw <= 2048:
        return hw
    for cand in range(2048, 127, -128):
        if hw % cand == 0:
            return cand
    return hw


def share_layer_forward(x, reg, frame, share):
    """x: (bsize, ch, h, w) NCHW (like the PyTorch module), returns
    (bsize, 2*ch, h, w)."""
    bsize, ch, h, w = x.shape
    assert bsize == frame, "ShareLayer requires bsize == frame"

    # Mirror the reference's chunk of the registration offsets.
    # TODO(synk): batch_map_offsets is `return x` in the reference module, so
    # reg_in / reg_out never influence the output; they are accepted and
    # discarded here.
    _reg_in, _reg_out = jnp.split(reg, 2, axis=1)
    del _reg_in, _reg_out

    hw = h * w
    x3 = x.reshape(bsize, ch, hw).astype(jnp.float32)     # lane-dense view
    t = _pick_tile(hw)
    grid = (hw // t,)

    out = pl.pallas_call(
        functools.partial(_share_kernel, share=bool(share),
                          frame=int(frame), ch=int(ch)),
        out_shape=jax.ShapeDtypeStruct((bsize, 2 * ch, hw), jnp.float32),
        grid=grid,
        in_specs=[pl.BlockSpec((bsize, ch, t), lambda j: (0, 0, j))],
        out_specs=pl.BlockSpec((bsize, 2 * ch, t), lambda j: (0, 0, j)),
        compiler_params=pltpu.CompilerParams(
            dimension_semantics=("parallel",)),
    )(x3)
    return out.reshape(bsize, 2 * ch, h, w)


def _share_layer_ref(x, reg, frame, share):
    """Pure-JAX reference of ShareLayer.forward for validation."""
    del reg
    if share:
        x_max = jnp.max(x, axis=0, keepdims=True)
        x_mean = jnp.mean(x, axis=0, keepdims=True)
        shared = jnp.concatenate([x_max, x_mean], axis=1)
        return jnp.broadcast_to(shared, (frame,) + shared.shape[1:])
    return jnp.concatenate([x, x], axis=1)


if __name__ == "__main__":
    key = jax.random.PRNGKey(0)
    k1, k2 = jax.random.split(key)

    frame = 2                      # bsize == frame (required by the view())
    ch, h, w = 4, 16, 16
    x = jax.random.normal(k1, (frame, ch, h, w), jnp.float32)
    reg = jax.random.normal(k2, (frame, 2 * ch, h, w), jnp.float32)  # unused offsets

    fwd_share = jax.jit(functools.partial(share_layer_forward,
                                          frame=frame, share=True))
    fwd_dup = jax.jit(functools.partial(share_layer_forward,
                                        frame=frame, share=False))

    out_share = fwd_share(x, reg)
    out_dup = fwd_dup(x, reg)
    jax.block_until_ready((out_share, out_dup))

    ref_share = _share_layer_ref(x, reg, frame, True)
    ref_dup = _share_layer_ref(x, reg, frame, False)

    assert out_share.shape == (frame, 2 * ch, h, w)
    assert out_dup.shape == (frame, 2 * ch, h, w)
    assert bool(jnp.all(jnp.isfinite(out_share)))
    assert bool(jnp.allclose(out_share, ref_share, atol=1e-6, rtol=1e-6))
    assert bool(jnp.allclose(out_dup, ref_dup, atol=1e-6, rtol=1e-6))
    print("KERNEL_OK")
</pallas_src>

<mosaic_0001>
module attributes {stable_mosaic.version = 11 : i64} {
  func.func @_share_kernel(%arg0: i32, %arg1: memref<2x4x256xf32, #tpu.memory_space<vmem>>, %arg2: memref<2x8x256xf32, #tpu.memory_space<vmem>>) attributes {dimension_semantics = [#tpu.dimension_semantics<parallel>], iteration_bounds = array<i64: 1>, scalar_prefetch = 0 : i64, scratch_operands = 0 : i64, tpu.core_type = #tpu.core_type<tc>, window_params = [{transform_indices = @transform_0, window_bounds = array<i64: 2, 4, 256>}, {transform_indices = @transform_1, window_bounds = array<i64: 2, 8, 256>}]} {
    %c0 = arith.constant 0 : index
    %c0_0 = arith.constant 0 : index
    %c0_1 = arith.constant 0 : index
    %0 = vector.load %arg1[%c0, %c0_0, %c0_1] : memref<2x4x256xf32, #tpu.memory_space<vmem>>, vector<2x4x256xf32>
    %cst = arith.constant dense<0xFF800000> : vector<4x256xf32>
    %1 = vector.multi_reduction <maximumf>, %0, %cst [0] : vector<2x4x256xf32> to vector<4x256xf32>
    %cst_2 = arith.constant dense<0.000000e+00> : vector<4x256xf32>
    %2 = vector.multi_reduction <add>, %0, %cst_2 [0] : vector<2x4x256xf32> to vector<4x256xf32>
    %cst_3 = arith.constant 5.000000e-01 : f32
    %3 = vector.broadcast %cst_3 : f32 to vector<4x256xf32>
    %4 = arith.mulf %2, %3 : vector<4x256xf32>
    %5 = vector.shape_cast %1 : vector<4x256xf32> to vector<1x4x256xf32>
    %6 = vector.shape_cast %5 : vector<1x4x256xf32> to vector<1x4x256xf32>
    %7 = vector.broadcast %6 : vector<1x4x256xf32> to vector<2x4x256xf32>
    %c0_4 = arith.constant 0 : index
    %c0_5 = arith.constant 0 : index
    %c0_6 = arith.constant 0 : index
    %8 = vector.load %arg2[%c0_4, %c0_5, %c0_6] : memref<2x8x256xf32, #tpu.memory_space<vmem>>, vector<2x4x256xf32>
    tpu.vector_store %arg2[%c0_4, %c0_5, %c0_6], %7 {strides = array<i32>} : memref<2x8x256xf32, #tpu.memory_space<vmem>>, vector<2x4x256xf32>,
    %9 = vector.shape_cast %4 : vector<4x256xf32> to vector<1x4x256xf32>
    %10 = vector.shape_cast %9 : vector<1x4x256xf32> to vector<1x4x256xf32>
    %11 = vector.broadcast %10 : vector<1x4x256xf32> to vector<2x4x256xf32>
    %c0_7 = arith.constant 0 : index
    %c4 = arith.constant 4 : index
    %c0_8 = arith.constant 0 : index
    %12 = vector.load %arg2[%c0_7, %c4, %c0_8] : memref<2x8x256xf32, #tpu.memory_space<vmem>>, vector<2x4x256xf32>
    tpu.vector_store %arg2[%c0_7, %c4, %c0_8], %11 {strides = array<i32>} : memref<2x8x256xf32, #tpu.memory_space<vmem>>, vector<2x4x256xf32>,
    return
  }
  func.func @transform_0(%arg0: i32) -> (i32, i32, i32) {
    %c0_i32 = arith.constant 0 : i32
    %c0_i32_0 = arith.constant 0 : i32
    %c0_i32_1 = arith.constant 0 : i32
    return %c0_i32, %c0_i32_0, %arg0 : i32, i32, i32
  }
  func.func @transform_1(%arg0: i32) -> (i32, i32, i32) {
    %c0_i32 = arith.constant 0 : i32
    %c0_i32_0 = arith.constant 0 : i32
    %c0_i32_1 = arith.constant 0 : i32
    return %c0_i32, %c0_i32_0, %arg0 : i32, i32, i32
  }
}

</mosaic_0001>

<llo_original>
// kernel: share_layer_forward.1
$region0: #{share_layer_forward.1}
  #allocation0 [shape = 'u32[]', space=smem, size = 0x4, offset = 0x4, fixed_abs, tag = 'smem constant byte address 0x4 - core index']
  #allocation1 [shape = 'u32[144,128]{1,0:T(1,128)}', space=vmem, size = 0x12000, scoped, tag = 'internal scratch']
  %s0 = inlined_call_operand.vmem [shape: f32[2,4,256], index: 0, kind: input, shape index: {}]
  %s1 = inlined_call_operand.vmem [shape: f32[2,8,256], index: 1, kind: output, shape index: {}]
  %s2 = sld [smem:[#allocation0]]
  $region14: #{share_layer_forward.1} parent=0
    _
  %s4 = ssub.s32 1, %s2
  %s5 = scalar_select 0, %s4, %s2
  // Predicated region
  $region2: #{share_layer_forward.1} parent=0 // pred_check
    _
  $region3: #{share_layer_forward.1} parent=0 // pred_check_branch
    %7 = sbr.rel (0) target = $region5
  $region4: #{share_layer_forward.1} parent=0 // pred_region
    _
  $region5: #{share_layer_forward.1} parent=0 // pred_fallthru
    _
  %v8 = vld [vmem:[%s0] sm:$0xff]
  %v9 = vld [vmem:[%s0 + $0x8] sm:$0xff]
  %v10 = vmax.f32 %v8, %v9
  %v13 = vcombine.high %v8, %v8
  %v14 = vcombine.high %v9, %v9
  %vm17 = vcmask 1043456
  %v18 = vsel %vm17, %v8, 0.0
  %v19 = vsel %vm17, %v9, 0.0
  %v20 = vadd.f32 %v18, %v19
  %v21 = vsel %vm17, %v13, 0.0
  %v22 = vsel %vm17, %v14, 0.0
  %v23 = vadd.f32 %v21, %v22
  %v24 = vmul.f32 %v20, 0.5
  %v25 = vmul.f32 %v23, 0.5
  %v27 = vcombine.high %v10, %v10
  %29 = vst [vmem:[%s1] sm:$0xf] %v10
  %30 = vst [vmem:[%s1 + $0x8] sm:$0xf] %v27
  %31 = vst [vmem:[%s1 + $0x10] sm:$0xf] %v10
  %32 = vst [vmem:[%s1 + $0x18] sm:$0xf] %v27
  %v35 = vrot.slane %v24, 4
  %v36 = vrot.slane %v25, 4
  %39 = vst [vmem:[%s1] sm:$0xf0] %v35
  %40 = vst [vmem:[%s1 + $0x8] sm:$0xf0] %v36
  %41 = vst [vmem:[%s1 + $0x10] sm:$0xf0] %v35
  %42 = vst [vmem:[%s1 + $0x18] sm:$0xf0] %v36
  // Predicated region
  $region6: #{share_layer_forward.1} parent=0 // pred_check
    _
  $region7: #{share_layer_forward.1} parent=0 // pred_check_branch
    %44 = sbr.rel (0) target = $region9
  $region8: #{share_layer_forward.1} parent=0 // pred_region
    _
  $region9: #{share_layer_forward.1} parent=0 // pred_fallthru
    _
  // Predicated region
  $region10: #{share_layer_forward.1} parent=0 // pred_check
    _
  $region11: #{share_layer_forward.1} parent=0 // pred_check_branch
    %46 = sbr.rel (0) target = $region13
  $region12: #{share_layer_forward.1} parent=0 // pred_region
    _
  $region13: #{share_layer_forward.1} parent=0 // pred_fallthru
    _

</llo_original>
